<compile_context>
chip_gen: v7x
topology: tpu7x:2x2x1
jax: 0.10.0
libtpu: 0.0.40
codegen_flags: <defaults>
</compile_context>

<pallas_src>
import math

import jax
import jax.numpy as jnp
from jax.experimental import pallas as pl
from jax.experimental.pallas import tpu as pltpu


def _round_up(n, m):
    return ((n + m - 1) // m) * m


def _edge_activation_kernel(w_ref, b_ref, x_ref, o_ref):
    # w_ref: (9,) f32 in SMEM (scalar-prefetched), b_ref: (1,) f32 in SMEM,
    # x_ref / o_ref: (tm, tn) f32 tiles in VMEM.
    x = x_ref[...]

    # Shared subexpressions (computed once, reused).
    x2 = x * x
    ax = jnp.abs(x)

    # Incremental weighted accumulation; bias folded into the init.
    acc = w_ref[0] * x + b_ref[0]                                      # x
    acc = acc + w_ref[1] * jnp.minimum(x2, 100.0)                      # clip(x^2): x^2 >= 0
    acc = acc + w_ref[2] * jnp.clip(x2 * x, -100.0, 100.0)             # clip(x^3)
    acc = acc + w_ref[3] * jnp.exp(jnp.clip(x, -10.0, 10.0))           # exp
    acc = acc + w_ref[4] * jnp.log(ax + 1.0)                           # log(|x|+1)
    acc = acc + w_ref[5] * jnp.sqrt(ax)                                # sqrt(|x|)
    acc = acc + w_ref[6] * jnp.tanh(x)                                 # tanh
    acc = acc + w_ref[7] * jnp.sin(
        jnp.clip(x, -10.0 * math.pi, 10.0 * math.pi))                  # sin(clip)
    acc = acc + w_ref[8] * ax                                          # |x|

    o_ref[...] = acc


def _run_2d(x2d, weights, bias, tm, tn):
    """Run the streaming kernel on a 2-D f32 array (ragged blocks allowed)."""
    B, F = x2d.shape
    # Clamp tile to the array extent while keeping (8,128) alignment of the
    # block shape itself; ragged last blocks are handled by the pipeline.
    tm = min(tm, _round_up(B, 8))
    tn = min(tn, _round_up(F, 128))
    grid = (pl.cdiv(B, tm), pl.cdiv(F, tn))

    return pl.pallas_call(
        _edge_activation_kernel,
        out_shape=jax.ShapeDtypeStruct((B, F), jnp.float32),
        grid_spec=pltpu.PrefetchScalarGridSpec(
            num_scalar_prefetch=2,          # weights (9,), bias (1,) -> SMEM once
            grid=grid,
            in_specs=[
                pl.BlockSpec((tm, tn), lambda i, j, w, b: (i, j)),     # x tile
            ],
            out_specs=pl.BlockSpec((tm, tn), lambda i, j, w, b: (i, j)),
        ),
        compiler_params=pltpu.CompilerParams(
            dimension_semantics=("parallel", "parallel"),
            vmem_limit_bytes=32 * 1024 * 1024,
        ),
    )(weights, bias, x2d)


def edge_activation(x, weights, bias, *, tm=512, tn=1024):
    """x: float array (any rank >= 1). Returns x.shape + (1,) f32, matching
    the PyTorch forward.

    Main path (trailing dim >= 128): operate directly on (prod(leading), F)
    with ragged grid blocks -> zero wrapper-side padding/slicing HBM passes.
    Narrow path (trailing dim < 128): flatten to a lane-dense (rows, lanes)
    slab so stores stay unmasked and no pad lanes are processed.
    """
    x = jnp.asarray(x, jnp.float32)
    weights = jnp.asarray(weights, jnp.float32)
    bias = jnp.asarray(bias, jnp.float32)

    orig_shape = x.shape
    F = orig_shape[-1]

    if F >= 128:
        lead = math.prod(orig_shape[:-1]) if x.ndim > 1 else 1
        y = _run_2d(x.reshape(lead, F), weights, bias, tm, tn)
        y = y.reshape(orig_shape)
    else:
        # Lane-dense slab for narrow trailing dims (elementwise op => layout is
        # free to choose). Small pad+slice only on this path; negligible vs the
        # masked-store / padded-lane waste of a <128 lane axis.
        total = x.size
        flat = x.reshape(-1)
        lane_w = min(tn, _round_up(total, 128))
        rows = pl.cdiv(total, lane_w)
        padded = rows * lane_w
        if padded != total:
            flat = jnp.pad(flat, (0, padded - total))
        y = _run_2d(flat.reshape(rows, lane_w), weights, bias, tm, lane_w)
        y = y.reshape(-1)[:total].reshape(orig_shape)

    # PyTorch: matmul(features, w.unsqueeze(0).T) -> trailing singleton dim.
    return y[..., None]


def edge_activation_ref(x, weights, bias):
    """Pure-JAX reference mirroring the PyTorch forward."""
    x = jnp.asarray(x, jnp.float32)
    feats = jnp.stack(
        [
            x,
            jnp.clip(x * x, -100.0, 100.0),
            jnp.clip(x * x * x, -100.0, 100.0),
            jnp.exp(jnp.clip(x, -10.0, 10.0)),
            jnp.log(jnp.abs(x) + 1.0),
            jnp.sqrt(jnp.abs(x)),
            jnp.tanh(x),
            jnp.sin(jnp.clip(x, -10.0 * math.pi, 10.0 * math.pi)),
            jnp.abs(x),
        ],
        axis=-1,
    )
    return feats @ weights[:, None] + bias


if __name__ == "__main__":
    key = jax.random.PRNGKey(0)
    kx, kw = jax.random.split(key)

    # Deterministic parameter init (torch.randn(9) analogue + zero bias).
    weights = jax.random.normal(kw, (9,), dtype=jnp.float32)
    bias = jnp.zeros((1,), dtype=jnp.float32)

    # 1) Small 2D input (batch, features) — main lane-aligned path.
    B, F = 16, 256
    x = jax.random.normal(kx, (B, F), dtype=jnp.float32) * 2.0
    out = jax.block_until_ready(edge_activation(x, weights, bias))
    ref = edge_activation_ref(x, weights, bias)
    assert out.shape == (B, F, 1), out.shape
    assert jnp.allclose(out, ref, atol=1e-4, rtol=1e-5), "mismatch vs reference"

    # 2) Non-divisible shape — exercises ragged-block handling (no wrapper pad).
    x2 = jax.random.normal(kx, (13, 200), dtype=jnp.float32)
    out2 = jax.block_until_ready(edge_activation(x2, weights, bias))
    ref2 = edge_activation_ref(x2, weights, bias)
    assert out2.shape == (13, 200, 1), out2.shape
    assert jnp.allclose(out2, ref2, atol=1e-4, rtol=1e-5), "mismatch vs reference (ragged)"

    # 3) Narrow trailing dim, 3-D input — exercises the lane-dense flat path.
    x3 = jax.random.normal(kx, (4, 8, 16), dtype=jnp.float32)
    out3 = jax.block_until_ready(edge_activation(x3, weights, bias))
    ref3 = edge_activation_ref(x3, weights, bias)
    assert out3.shape == (4, 8, 16, 1), out3.shape
    assert jnp.allclose(out3, ref3, atol=1e-4, rtol=1e-5), "mismatch vs reference (narrow)"

    print("KERNEL_OK")
</pallas_src>

<mosaic_0001>
module attributes {stable_mosaic.version = 11 : i64} {
  func.func @_edge_activation_kernel(%arg0: i32, %arg1: i32, %arg2: memref<9xf32, #tpu.memory_space<smem>>, %arg3: memref<1xf32, #tpu.memory_space<smem>>, %arg4: memref<16x256xf32, #tpu.memory_space<vmem>>, %arg5: memref<16x256xf32, #tpu.memory_space<vmem>>) attributes {dimension_semantics = [#tpu.dimension_semantics<parallel>, #tpu.dimension_semantics<parallel>], iteration_bounds = array<i64: 1, 1>, scalar_prefetch = 2 : i64, scratch_operands = 0 : i64, tpu.core_type = #tpu.core_type<tc>, window_params = [{transform_indices = @transform_0, window_bounds = array<i64: 16, 256>}, {transform_indices = @transform_1, window_bounds = array<i64: 16, 256>}]} {
    %c0 = arith.constant 0 : index
    %c0_0 = arith.constant 0 : index
    %0 = vector.load %arg4[%c0, %c0_0] : memref<16x256xf32, #tpu.memory_space<vmem>>, vector<16x256xf32>
    %1 = arith.mulf %0, %0 : vector<16x256xf32>
    %2 = math.absf %0 : vector<16x256xf32>
    %c0_1 = arith.constant 0 : index
    %3 = memref.load %arg2[%c0_1] : memref<9xf32, #tpu.memory_space<smem>>
    %4 = vector.broadcast %3 : f32 to vector<16x256xf32>
    %5 = arith.mulf %4, %0 : vector<16x256xf32>
    %c0_2 = arith.constant 0 : index
    %6 = memref.load %arg3[%c0_2] : memref<1xf32, #tpu.memory_space<smem>>
    %7 = vector.broadcast %6 : f32 to vector<16x256xf32>
    %8 = arith.addf %5, %7 : vector<16x256xf32>
    %c1 = arith.constant 1 : index
    %9 = memref.load %arg2[%c1] : memref<9xf32, #tpu.memory_space<smem>>
    %cst = arith.constant 1.000000e+02 : f32
    %10 = vector.broadcast %cst : f32 to vector<16x256xf32>
    %11 = arith.minimumf %1, %10 : vector<16x256xf32>
    %12 = vector.broadcast %9 : f32 to vector<16x256xf32>
    %13 = arith.mulf %12, %11 : vector<16x256xf32>
    %14 = arith.addf %8, %13 : vector<16x256xf32>
    %c2 = arith.constant 2 : index
    %15 = memref.load %arg2[%c2] : memref<9xf32, #tpu.memory_space<smem>>
    %16 = arith.mulf %1, %0 : vector<16x256xf32>
    %cst_3 = arith.constant -1.000000e+02 : f32
    %cst_4 = arith.constant 1.000000e+02 : f32
    %17 = vector.broadcast %cst_3 : f32 to vector<16x256xf32>
    %18 = arith.maximumf %17, %16 : vector<16x256xf32>
    %19 = vector.broadcast %cst_4 : f32 to vector<16x256xf32>
    %20 = arith.minimumf %19, %18 : vector<16x256xf32>
    %21 = vector.broadcast %15 : f32 to vector<16x256xf32>
    %22 = arith.mulf %21, %20 : vector<16x256xf32>
    %23 = arith.addf %14, %22 : vector<16x256xf32>
    %c3 = arith.constant 3 : index
    %24 = memref.load %arg2[%c3] : memref<9xf32, #tpu.memory_space<smem>>
    %cst_5 = arith.constant -1.000000e+01 : f32
    %cst_6 = arith.constant 1.000000e+01 : f32
    %25 = vector.broadcast %cst_5 : f32 to vector<16x256xf32>
    %26 = arith.maximumf %25, %0 : vector<16x256xf32>
    %27 = vector.broadcast %cst_6 : f32 to vector<16x256xf32>
    %28 = arith.minimumf %27, %26 : vector<16x256xf32>
    %29 = math.exp %28 : vector<16x256xf32>
    %30 = vector.broadcast %24 : f32 to vector<16x256xf32>
    %31 = arith.mulf %30, %29 : vector<16x256xf32>
    %32 = arith.addf %23, %31 : vector<16x256xf32>
    %c4 = arith.constant 4 : index
    %33 = memref.load %arg2[%c4] : memref<9xf32, #tpu.memory_space<smem>>
    %cst_7 = arith.constant 1.000000e+00 : f32
    %34 = vector.broadcast %cst_7 : f32 to vector<16x256xf32>
    %35 = arith.addf %2, %34 : vector<16x256xf32>
    %36 = math.log %35 : vector<16x256xf32>
    %37 = vector.broadcast %33 : f32 to vector<16x256xf32>
    %38 = arith.mulf %37, %36 : vector<16x256xf32>
    %39 = arith.addf %32, %38 : vector<16x256xf32>
    %c5 = arith.constant 5 : index
    %40 = memref.load %arg2[%c5] : memref<9xf32, #tpu.memory_space<smem>>
    %41 = math.sqrt %2 : vector<16x256xf32>
    %42 = vector.broadcast %40 : f32 to vector<16x256xf32>
    %43 = arith.mulf %42, %41 : vector<16x256xf32>
    %44 = arith.addf %39, %43 : vector<16x256xf32>
    %c6 = arith.constant 6 : index
    %45 = memref.load %arg2[%c6] : memref<9xf32, #tpu.memory_space<smem>>
    %46 = math.tanh %0 : vector<16x256xf32>
    %47 = vector.broadcast %45 : f32 to vector<16x256xf32>
    %48 = arith.mulf %47, %46 : vector<16x256xf32>
    %49 = arith.addf %44, %48 : vector<16x256xf32>
    %c7 = arith.constant 7 : index
    %50 = memref.load %arg2[%c7] : memref<9xf32, #tpu.memory_space<smem>>
    %cst_8 = arith.constant -31.415926 : f32
    %cst_9 = arith.constant 31.415926 : f32
    %51 = vector.broadcast %cst_8 : f32 to vector<16x256xf32>
    %52 = arith.maximumf %51, %0 : vector<16x256xf32>
    %53 = vector.broadcast %cst_9 : f32 to vector<16x256xf32>
    %54 = arith.minimumf %53, %52 : vector<16x256xf32>
    %55 = math.sin %54 : vector<16x256xf32>
    %56 = vector.broadcast %50 : f32 to vector<16x256xf32>
    %57 = arith.mulf %56, %55 : vector<16x256xf32>
    %58 = arith.addf %49, %57 : vector<16x256xf32>
    %c8 = arith.constant 8 : index
    %59 = memref.load %arg2[%c8] : memref<9xf32, #tpu.memory_space<smem>>
    %60 = vector.broadcast %59 : f32 to vector<16x256xf32>
    %61 = arith.mulf %60, %2 : vector<16x256xf32>
    %62 = arith.addf %58, %61 : vector<16x256xf32>
    %c0_10 = arith.constant 0 : index
    %c0_11 = arith.constant 0 : index
    %63 = vector.load %arg5[%c0_10, %c0_11] : memref<16x256xf32, #tpu.memory_space<vmem>>, vector<16x256xf32>
    tpu.vector_store %arg5[%c0_10, %c0_11], %62 {strides = array<i32>} : memref<16x256xf32, #tpu.memory_space<vmem>>, vector<16x256xf32>,
    return
  }
  func.func @transform_0(%arg0: i32, %arg1: i32, %arg2: memref<9xf32, #tpu.memory_space<smem>>, %arg3: memref<1xf32, #tpu.memory_space<smem>>) -> (i32, i32) {
    %c0_i32 = arith.constant 0 : i32
    return %arg0, %arg1 : i32, i32
  }
  func.func @transform_1(%arg0: i32, %arg1: i32, %arg2: memref<9xf32, #tpu.memory_space<smem>>, %arg3: memref<1xf32, #tpu.memory_space<smem>>) -> (i32, i32) {
    %c0_i32 = arith.constant 0 : i32
    return %arg0, %arg1 : i32, i32
  }
}

</mosaic_0001>

<llo_original>
// kernel: tpu_custom_call.1
$region0: #{tpu_custom_call.1}
  #allocation0 [shape = 'u32[]', space=smem, size = 0x4, offset = 0x4, fixed_abs, tag = 'smem constant byte address 0x4 - core index']
  #allocation1 [shape = 'u32[144,128]{1,0:T(1,128)}', space=vmem, size = 0x12000, scoped, tag = 'internal scratch']
  #allocation2 [shape = 's32[1]{0}', space=sflag, size = 0x4, scoped, tag = 'scoped memory for tpu_custom_call.1']
  #allocation3 [shape = 'u8[512]{0}', space=smem, size = 0x200, scoped, tag = 'prefetched SMEM operand 0']
  #allocation4 [shape = 'f32[1]{0:T(128)S(6)}', space=smem, size = 0x200, scoped, tag = 'prefetched SMEM operand 1']
  %s0 = inlined_call_operand.vmem [shape: f32[9], index: 0, kind: input, shape index: {}]
  %s1 = inlined_call_operand.<no memory space> [shape: f32[1], index: 1, kind: input, shape index: {}]
  %s2 = inlined_call_operand.hbm [shape: f32[16,256], index: 2, kind: input, shape index: {}]
  %s3 = inlined_call_operand.hbm [shape: f32[16,256], index: 3, kind: output, shape index: {}]
  %s4 = sld [smem:[#allocation0]]
  $region18: #{tpu_custom_call.1} parent=0
    _
  %s6 = ssub.s32 1, %s4
  %s7 = scalar_select 0, %s6, %s4
  %s8 = sshll.u32 %s0, 4
  %s9 = int_to_ptr.vmem [resolvable:$true] %s8
  %11 = dma.vmem_to_smem %s9, 16, [#allocation3], [#allocation2]
  %12 = sst [smem:[#allocation4]] %s1
  %13 = dma.done [#allocation2], 16
  %14 = sfence
  $region1: #{tpu_custom_call.1} parent=0
    #allocation5 [shape = 'u8[16384]{0}', space=vmem, size = 0x4000, scoped, tag = 'input window, operand 2, single buffered']
    #allocation6 [shape = 's32[1]{0}', space=sflag, size = 0x4, scoped, tag = 'scoped memory for tpu_custom_call.1']
    #allocation7 [shape = 's32[1]{0}', space=sflag, size = 0x4, scoped, tag = 'scoped memory for tpu_custom_call.1']
    #allocation8 [shape = 'u8[16384]{0}', space=vmem, size = 0x4000, scoped, tag = 'output window, operand 0, single buffered']
    %15 = vsyncpa [#allocation6], 0
    %16 = vsyncpa [#allocation7], 0
    // Predicated region
    $region2: #{tpu_custom_call.1} parent=1 // pred_check
      _
    $region3: #{tpu_custom_call.1} parent=1 // pred_check_branch
      %18 = sbr.rel (0) target = $region5
    $region4: #{tpu_custom_call.1} parent=1 // pred_region
      %s20 = ssub.s32 512, 512
      %21 = vsyncadd [#allocation6], %s20
      %s22 = sshll.u32 [#allocation5], 4
      %s23 = int_to_ptr.vmem [resolvable:$true] %s22
      %28 = dma.hbm_to_vmem [thread:$0]  %s2, 512, %s23, [#allocation6], 256, 256, 16
    $region5: #{tpu_custom_call.1} parent=1 // pred_fallthru
      _
    // Predicated region
    $region6: #{tpu_custom_call.1} parent=1 // pred_check
      _
    $region7: #{tpu_custom_call.1} parent=1 // pred_check_branch
      %30 = sbr.rel (0) target = $region9
    $region8: #{tpu_custom_call.1} parent=1 // pred_region
      %31 = dma.done [#allocation6], 512
    $region9: #{tpu_custom_call.1} parent=1 // pred_fallthru
      _
    %v32 = vld [vmem:[#allocation5] sm:$0xff]
    %v33 = vld [vmem:[#allocation5 + $0x8] sm:$0xff]
    %v34 = vld [vmem:[#allocation5 + $0x10] sm:$0xff]
    %v35 = vld [vmem:[#allocation5 + $0x18] sm:$0xff]
    %v36 = vmul.f32 %v32, %v32
    %v37 = vmul.f32 %v33, %v33
    %v38 = vmul.f32 %v34, %v34
    %v39 = vmul.f32 %v35, %v35
    %v40 = vand.u32 2147483647, %v32
    %v41 = vand.u32 2147483647, %v33
    %v42 = vand.u32 2147483647, %v34
    %v43 = vand.u32 2147483647, %v35
    %s44 = sld [smem:[#allocation3]]
    %v45 = vstv %s44
    %v46 = vmul.f32 %v45, %v32
    %v47 = vmul.f32 %v45, %v33
    %v48 = vmul.f32 %v45, %v34
    %v49 = vmul.f32 %v45, %v35
    %s50 = sld [smem:[#allocation4]]
    %v51 = vstv %s50
    %v52 = vadd.f32 %v46, %v51
    %v53 = vadd.f32 %v47, %v51
    %v54 = vadd.f32 %v48, %v51
    %v55 = vadd.f32 %v49, %v51
    %s56 = sld [smem:[#allocation3 + $0x1]]
    %v57 = vmin.f32 %v36, 100.0
    %v58 = vmin.f32 %v37, 100.0
    %v59 = vmin.f32 %v38, 100.0
    %v60 = vmin.f32 %v39, 100.0
    %v61 = vstv %s56
    %v62 = vmul.f32 %v61, %v57
    %v63 = vmul.f32 %v61, %v58
    %v64 = vmul.f32 %v61, %v59
    %v65 = vmul.f32 %v61, %v60
    %v66 = vadd.f32 %v52, %v62
    %v67 = vadd.f32 %v53, %v63
    %v68 = vadd.f32 %v54, %v64
    %v69 = vadd.f32 %v55, %v65
    %s70 = sld [smem:[#allocation3 + $0x2]]
    %v71 = vmul.f32 %v36, %v32
    %v72 = vmul.f32 %v37, %v33
    %v73 = vmul.f32 %v38, %v34
    %v74 = vmul.f32 %v39, %v35
    %v75 = vmax.f32 %v71, -100.0
    %v76 = vmax.f32 %v72, -100.0
    %v77 = vmax.f32 %v73, -100.0
    %v78 = vmax.f32 %v74, -100.0
    %v79 = vmin.f32 %v75, 100.0
    %v80 = vmin.f32 %v76, 100.0
    %v81 = vmin.f32 %v77, 100.0
    %v82 = vmin.f32 %v78, 100.0
    %v83 = vstv %s70
    %v84 = vmul.f32 %v83, %v79
    %v85 = vmul.f32 %v83, %v80
    %v86 = vmul.f32 %v83, %v81
    %v87 = vmul.f32 %v83, %v82
    %v88 = vadd.f32 %v66, %v84
    %v89 = vadd.f32 %v67, %v85
    %v90 = vadd.f32 %v68, %v86
    %v91 = vadd.f32 %v69, %v87
    %s92 = sld [smem:[#allocation3 + $0x3]]
    %v93 = vmax.f32 %v32, -10.0
    %v94 = vmax.f32 %v33, -10.0
    %v95 = vmax.f32 %v34, -10.0
    %v96 = vmax.f32 %v35, -10.0
    %v97 = vmin.f32 %v93, 10.0
    %v98 = vmin.f32 %v94, 10.0
    %v99 = vmin.f32 %v95, 10.0
    %v100 = vmin.f32 %v96, 10.0
    %v101 = vmul.f32 %v97, 1.442695
    %v102 = vpow.pop %v101
    %v103 = vmul.f32 %v98, 1.442695
    %v104 = vpow.pop %v103
    %v105 = vmul.f32 %v99, 1.442695
    %v106 = vpow.pop %v105
    %v107 = vmul.f32 %v100, 1.442695
    %v108 = vpow.pop %v107
    %v109 = vstv %s92
    %v110 = vmul.f32 %v109, %v102
    %v111 = vmul.f32 %v109, %v104
    %v112 = vmul.f32 %v109, %v106
    %v113 = vmul.f32 %v109, %v108
    %v114 = vadd.f32 %v88, %v110
    %v115 = vadd.f32 %v89, %v111
    %v116 = vadd.f32 %v90, %v112
    %v117 = vadd.f32 %v91, %v113
    %s118 = sld [smem:[#allocation3 + $0x4]]
    %v119 = vadd.f32 %v40, 1.0
    %v120 = vadd.f32 %v41, 1.0
    %v121 = vadd.f32 %v42, 1.0
    %v122 = vadd.f32 %v43, 1.0
    %v123 = vlog2.pop %v119
    %v124 = vmul.f32 %v123, 0.6931472
    %v125 = vlog2.pop %v120
    %v126 = vmul.f32 %v125, 0.6931472
    %v127 = vlog2.pop %v121
    %v128 = vmul.f32 %v127, 0.6931472
    %v129 = vlog2.pop %v122
    %v130 = vmul.f32 %v129, 0.6931472
    %v131 = vstv %s118
    %v132 = vmul.f32 %v131, %v124
    %v133 = vmul.f32 %v131, %v126
    %v134 = vmul.f32 %v131, %v128
    %v135 = vmul.f32 %v131, %v130
    %v136 = vadd.f32 %v114, %v132
    %v137 = vadd.f32 %v115, %v133
    %v138 = vadd.f32 %v116, %v134
    %v139 = vadd.f32 %v117, %v135
    %s140 = sld [smem:[#allocation3 + $0x5]]
    %v141 = vrsqrt.pop %v40
    %v142 = vmul.f32 %v40, %v141
    %vm143 = vcmp.eq.f32.partialorder %v40, inf
    %v144 = vsel %vm143, %v40, %v142
    %vm145 = vcmp.eq.f32.partialorder %v40, 0.0
    %v146 = vand.u32 %v40, 2147483648
    %v147 = vsel %vm145, %v146, %v144
    %v148 = vrsqrt.pop %v41
    %v149 = vmul.f32 %v41, %v148
    %vm150 = vcmp.eq.f32.partialorder %v41, inf
    %v151 = vsel %vm150, %v41, %v149
    %vm152 = vcmp.eq.f32.partialorder %v41, 0.0
    %v153 = vand.u32 %v41, 2147483648
    %v154 = vsel %vm152, %v153, %v151
    %v155 = vrsqrt.pop %v42
    %v156 = vmul.f32 %v42, %v155
    %vm157 = vcmp.eq.f32.partialorder %v42, inf
    %v158 = vsel %vm157, %v42, %v156
    %vm159 = vcmp.eq.f32.partialorder %v42, 0.0
    %v160 = vand.u32 %v42, 2147483648
    %v161 = vsel %vm159, %v160, %v158
    %v162 = vrsqrt.pop %v43
    %v163 = vmul.f32 %v43, %v162
    %vm164 = vcmp.eq.f32.partialorder %v43, inf
    %v165 = vsel %vm164, %v43, %v163
    %vm166 = vcmp.eq.f32.partialorder %v43, 0.0
    %v167 = vand.u32 %v43, 2147483648
    %v168 = vsel %vm166, %v167, %v165
    %v169 = vstv %s140
    %v170 = vmul.f32 %v169, %v147
    %v171 = vmul.f32 %v169, %v154
    %v172 = vmul.f32 %v169, %v161
    %v173 = vmul.f32 %v169, %v168
    %v174 = vadd.f32 %v136, %v170
    %v175 = vadd.f32 %v137, %v171
    %v176 = vadd.f32 %v138, %v172
    %v177 = vadd.f32 %v139, %v173
    %s178 = sld [smem:[#allocation3 + $0x6]]
    %v179 = vtanh.pop %v32
    %v180 = vtanh.pop %v33
    %v181 = vtanh.pop %v34
    %v182 = vtanh.pop %v35
    %v183 = vstv %s178
    %v184 = vmul.f32 %v183, %v179
    %v185 = vmul.f32 %v183, %v180
    %v186 = vmul.f32 %v183, %v181
    %v187 = vmul.f32 %v183, %v182
    %v188 = vadd.f32 %v174, %v184
    %v189 = vadd.f32 %v175, %v185
    %v190 = vadd.f32 %v176, %v186
    %v191 = vadd.f32 %v177, %v187
    %s192 = sld [smem:[#allocation3 + $0x7]]
    %v193 = vmax.f32 %v32, -31.415926
    %v194 = vmax.f32 %v33, -31.415926
    %v195 = vmax.f32 %v34, -31.415926
    %v196 = vmax.f32 %v35, -31.415926
    %v197 = vmin.f32 %v193, 31.415926
    %v198 = vmin.f32 %v194, 31.415926
    %v199 = vmin.f32 %v195, 31.415926
    %v200 = vmin.f32 %v196, 31.415926
    %v201 = vand.u32 2147483647, %v197
    %vm202 = vcmp.le.f32.partialorder %v201, 0.7853982
    %vm203 = vcmp.lt.s32.totalorder %v197, 0
    %v204 = vand.u32 %v197, 2139095040
    %v205 = vshrl.u32 %v204, 23
    %v206 = vsub.s32 %v205, 127
    %v207 = vand.u32 2147483647, %v197
    %v208 = vand.u32 %v207, 8388607
    %v209 = vor.u32 %v208, 8388608
    %v210 = vsub.s32 0, %v209
    %v211 = vadd.s32 %v206, 1
    %vm212 = vcmp.gt.s32.totalorder %v211, 0
    %v213 = vsel %vm212, %v211, 0
    %v214 = vshrl.u32 %v213, 5
    %v215 = vand.u32 %v213, 31
    %v216 = vsub.s32 32, %v215
    %v217 = vshrl.u32 683565275, %v216
    %v218 = vshll.u32 683565275, %v215
    %v219 = vshrl.u32 2475754826, %v216
    %v220 = vor.u32 %v218, %v219
    %v221 = vshll.u32 2475754826, %v215
    %v222 = vshrl.u32 2131351028, %v216
    %v223 = vor.u32 %v221, %v222
    %v224 = vshll.u32 2131351028, %v215
    %v225 = vshrl.u32 2102212464, %v216
    %v226 = vor.u32 %v224, %v225
    %v227 = vshll.u32 2102212464, %v215
    %v228 = vshrl.u32 920167782, %v216
    %v229 = vor.u32 %v227, %v228
    %v230 = vshll.u32 920167782, %v215
    %v231 = vshrl.u32 1326507024, %v216
    %v232 = vor.u32 %v230, %v231
    %vm233 = vcmp.lt.s32.totalorder %v214, 1
    %vm234 = vcmp.lt.s32.totalorder %v214, 2
    %vm235 = vcmp.lt.s32.totalorder %v214, 3
    %vm236 = vcmp.lt.s32.totalorder %v214, 4
    %v237 = vsel %vm233, %v217, %v220
    %v238 = vsel %vm236, %v226, 2102212464
    %v239 = vsel %vm235, %v223, %v238
    %v240 = vsel %vm234, %v237, %v239
    %v241 = vsel %vm233, %v220, %v223
    %v242 = vsel %vm236, %v229, 920167782
    %v243 = vsel %vm235, %v226, %v242
    %v244 = vsel %vm234, %v241, %v243
    %v245 = vsel %vm233, %v223, %v226
    %v246 = vsel %vm236, %v232, 1326507024
    %v247 = vsel %vm235, %v229, %v246
    %v248 = vsel %vm234, %v245, %v247
    %v249 = vshll.u32 %v209, 8
    %v250 = vmul.u32.u64.compose %v249, %v248
    %v251 = vextract.low.u32 %v250
    %v252 = vextract.high.u32 %v250
    %v253 = vmul.u32.u64.compose %v249, %v244
    %v254 = vextract.low.u32 %v253
    %v255 = vextract.high.u32 %v253
    %v256 = vmul.u32 %v249, %v240
    %v257 = vadd.s32 %v252, %v254
    %vm258 = vc.u32 %v252, %v254
    %v259 = vadd.s32 %v255, 1
    %v260 = vsel %vm258, %v259, %v255
    %v261 = vadd.s32 %v256, %v260
    %v262 = vadd.s32 %v261, 536870912
    %v263 = vshrl.u32 %v262, 30
    %v264 = vshll.u32 %v263, 30
    %v265 = vsub.s32 %v261, %v264
    %vm266 = vcmp.lt.s32.totalorder %v265, 0
    %v267 = vsub.s32 0, %v265
    %v268 = vsel %vm266, %v267, %v265
    %v269 = vclz %v268
    %v270 = vsub.s32 %v269, 2
    %vm271 = vcmp.gt.s32.totalorder 0, %v270
    %v272 = vsel %vm271, 0, %v270
    %v273 = vsub.s32 32, %v272
    %v274 = vshll.u32 %v265, %v272
    %v275 = vshrl.u32 %v257, %v273
    %v276 = vor.u32 %v274, %v275
    %v277 = vsub.s32 4294967266, %v272
    %v278 = vadd.s32 %v277, 127
    %v279 = vshll.u32 %v278, 23
    %v280 = vor.u32 4788187, %v279
    %v281 = vand.u32 2147483647, %v280
    %v283 = vcvt.s32.f32 %v276
    %v284 = vmul.f32 %v283, %v281
    %v285 = vxor.u32 %v284, 2147483648
    %v286 = vsel %vm203, %v285, %v284
    %v287 = vsub.s32 4, %v263
    %v288 = vsel %vm203, %v287, %v263
    %v289 = vsel %vm202, %v197, %v286
    %v290 = vsel %vm202, 0, %v288
    %v291 = vcosq.f32.pop %v289
    %v292 = vsinq.f32.pop %v289
    %vm293 = vweird.f32 %v197
    %v294 = vadd.s32 %v290, 3
    %v295 = vand.u32 %v294, 3
    %vm296 = vcmp.lt.s32.totalorder %v295, 2
    %vm297 = vcmp.eq.s32.totalorder %v295, 0
    %v298 = vxor.u32 %v292, 2147483648
    %v299 = vsel %vm297, %v291, %v298
    %vm300 = vcmp.eq.s32.totalorder %v295, 2
    %v301 = vxor.u32 %v291, 2147483648
    %v302 = vsel %vm300, %v301, %v292
    %v303 = vsel %vm296, %v299, %v302
    %v304 = vsel %vm293, nan, %v303
    %v305 = vand.u32 2147483647, %v198
    %vm306 = vcmp.le.f32.partialorder %v305, 0.7853982
    %vm307 = vcmp.lt.s32.totalorder %v198, 0
    %v308 = vand.u32 %v198, 2139095040
    %v309 = vshrl.u32 %v308, 23
    %v310 = vsub.s32 %v309, 127
    %v311 = vand.u32 2147483647, %v198
    %v312 = vand.u32 %v311, 8388607
    %v313 = vor.u32 %v312, 8388608
    %v314 = vsub.s32 0, %v313
    %v315 = vadd.s32 %v310, 1
    %vm316 = vcmp.gt.s32.totalorder %v315, 0
    %v317 = vsel %vm316, %v315, 0
    %v318 = vshrl.u32 %v317, 5
    %v319 = vand.u32 %v317, 31
    %v320 = vsub.s32 32, %v319
    %v321 = vshrl.u32 683565275, %v320
    %v322 = vshll.u32 683565275, %v319
    %v323 = vshrl.u32 2475754826, %v320
    %v324 = vor.u32 %v322, %v323
    %v325 = vshll.u32 2475754826, %v319
    %v326 = vshrl.u32 2131351028, %v320
    %v327 = vor.u32 %v325, %v326
    %v328 = vshll.u32 2131351028, %v319
    %v329 = vshrl.u32 2102212464, %v320
    %v330 = vor.u32 %v328, %v329
    %v331 = vshll.u32 2102212464, %v319
    %v332 = vshrl.u32 920167782, %v320
    %v333 = vor.u32 %v331, %v332
    %v334 = vshll.u32 920167782, %v319
    %v335 = vshrl.u32 1326507024, %v320
    %v336 = vor.u32 %v334, %v335
    %vm337 = vcmp.lt.s32.totalorder %v318, 1
    %vm338 = vcmp.lt.s32.totalorder %v318, 2
    %vm339 = vcmp.lt.s32.totalorder %v318, 3
    %vm340 = vcmp.lt.s32.totalorder %v318, 4
    %v341 = vsel %vm337, %v321, %v324
    %v342 = vsel %vm340, %v330, 2102212464
    %v343 = vsel %vm339, %v327, %v342
    %v344 = vsel %vm338, %v341, %v343
    %v345 = vsel %vm337, %v324, %v327
    %v346 = vsel %vm340, %v333, 920167782
    %v347 = vsel %vm339, %v330, %v346
    %v348 = vsel %vm338, %v345, %v347
    %v349 = vsel %vm337, %v327, %v330
    %v350 = vsel %vm340, %v336, 1326507024
    %v351 = vsel %vm339, %v333, %v350
    %v352 = vsel %vm338, %v349, %v351
    %v353 = vshll.u32 %v313, 8
    %v354 = vmul.u32.u64.compose %v353, %v352
    %v355 = vextract.low.u32 %v354
    %v356 = vextract.high.u32 %v354
    %v357 = vmul.u32.u64.compose %v353, %v348
    %v358 = vextract.low.u32 %v357
    %v359 = vextract.high.u32 %v357
    %v360 = vmul.u32 %v353, %v344
    %v361 = vadd.s32 %v356, %v358
    %vm362 = vc.u32 %v356, %v358
    %v363 = vadd.s32 %v359, 1
    %v364 = vsel %vm362, %v363, %v359
    %v365 = vadd.s32 %v360, %v364
    %v366 = vadd.s32 %v365, 536870912
    %v367 = vshrl.u32 %v366, 30
    %v368 = vshll.u32 %v367, 30
    %v369 = vsub.s32 %v365, %v368
    %vm370 = vcmp.lt.s32.totalorder %v369, 0
    %v371 = vsub.s32 0, %v369
    %v372 = vsel %vm370, %v371, %v369
    %v373 = vclz %v372
    %v374 = vsub.s32 %v373, 2
    %vm375 = vcmp.gt.s32.totalorder 0, %v374
    %v376 = vsel %vm375, 0, %v374
    %v377 = vsub.s32 32, %v376
    %v378 = vshll.u32 %v369, %v376
    %v379 = vshrl.u32 %v361, %v377
    %v380 = vor.u32 %v378, %v379
    %v381 = vsub.s32 4294967266, %v376
    %v382 = vadd.s32 %v381, 127
    %v383 = vshll.u32 %v382, 23
    %v384 = vor.u32 4788187, %v383
    %v385 = vand.u32 2147483647, %v384
    %v387 = vcvt.s32.f32 %v380
    %v388 = vmul.f32 %v387, %v385
    %v389 = vxor.u32 %v388, 2147483648
    %v390 = vsel %vm307, %v389, %v388
    %v391 = vsub.s32 4, %v367
    %v392 = vsel %vm307, %v391, %v367
    %v393 = vsel %vm306, %v198, %v390
    %v394 = vsel %vm306, 0, %v392
    %v395 = vcosq.f32.pop %v393
    %v396 = vsinq.f32.pop %v393
    %vm397 = vweird.f32 %v198
    %v398 = vadd.s32 %v394, 3
    %v399 = vand.u32 %v398, 3
    %vm400 = vcmp.lt.s32.totalorder %v399, 2
    %vm401 = vcmp.eq.s32.totalorder %v399, 0
    %v402 = vxor.u32 %v396, 2147483648
    %v403 = vsel %vm401, %v395, %v402
    %vm404 = vcmp.eq.s32.totalorder %v399, 2
    %v405 = vxor.u32 %v395, 2147483648
    %v406 = vsel %vm404, %v405, %v396
    %v407 = vsel %vm400, %v403, %v406
    %v408 = vsel %vm397, nan, %v407
    %v409 = vand.u32 2147483647, %v199
    %vm410 = vcmp.le.f32.partialorder %v409, 0.7853982
    %vm411 = vcmp.lt.s32.totalorder %v199, 0
    %v412 = vand.u32 %v199, 2139095040
    %v413 = vshrl.u32 %v412, 23
    %v414 = vsub.s32 %v413, 127
    %v415 = vand.u32 2147483647, %v199
    %v416 = vand.u32 %v415, 8388607
    %v417 = vor.u32 %v416, 8388608
    %v418 = vsub.s32 0, %v417
    %v419 = vadd.s32 %v414, 1
    %vm420 = vcmp.gt.s32.totalorder %v419, 0
    %v421 = vsel %vm420, %v419, 0
    %v422 = vshrl.u32 %v421, 5
    %v423 = vand.u32 %v421, 31
    %v424 = vsub.s32 32, %v423
    %v425 = vshrl.u32 683565275, %v424
    %v426 = vshll.u32 683565275, %v423
    %v427 = vshrl.u32 2475754826, %v424
    %v428 = vor.u32 %v426, %v427
    %v429 = vshll.u32 2475754826, %v423
    %v430 = vshrl.u32 2131351028, %v424
    %v431 = vor.u32 %v429, %v430
    %v432 = vshll.u32 2131351028, %v423
    %v433 = vshrl.u32 2102212464, %v424
    %v434 = vor.u32 %v432, %v433
    %v435 = vshll.u32 2102212464, %v423
    %v436 = vshrl.u32 920167782, %v424
    %v437 = vor.u32 %v435, %v436
    %v438 = vshll.u32 920167782, %v423
    %v439 = vshrl.u32 1326507024, %v424
    %v440 = vor.u32 %v438, %v439
    %vm441 = vcmp.lt.s32.totalorder %v422, 1
    %vm442 = vcmp.lt.s32.totalorder %v422, 2
    %vm443 = vcmp.lt.s32.totalorder %v422, 3
    %vm444 = vcmp.lt.s32.totalorder %v422, 4
    %v445 = vsel %vm441, %v425, %v428
    %v446 = vsel %vm444, %v434, 2102212464
    %v447 = vsel %vm443, %v431, %v446
    %v448 = vsel %vm442, %v445, %v447
    %v449 = vsel %vm441, %v428, %v431
    %v450 = vsel %vm444, %v437, 920167782
    %v451 = vsel %vm443, %v434, %v450
    %v452 = vsel %vm442, %v449, %v451
    %v453 = vsel %vm441, %v431, %v434
    %v454 = vsel %vm444, %v440, 1326507024
    %v455 = vsel %vm443, %v437, %v454
    %v456 = vsel %vm442, %v453, %v455
    %v457 = vshll.u32 %v417, 8
    %v458 = vmul.u32.u64.compose %v457, %v456
    %v459 = vextract.low.u32 %v458
    %v460 = vextract.high.u32 %v458
    %v461 = vmul.u32.u64.compose %v457, %v452
    %v462 = vextract.low.u32 %v461
    %v463 = vextract.high.u32 %v461
    %v464 = vmul.u32 %v457, %v448
    %v465 = vadd.s32 %v460, %v462
    %vm466 = vc.u32 %v460, %v462
    %v467 = vadd.s32 %v463, 1
    %v468 = vsel %vm466, %v467, %v463
    %v469 = vadd.s32 %v464, %v468
    %v470 = vadd.s32 %v469, 536870912
    %v471 = vshrl.u32 %v470, 30
    %v472 = vshll.u32 %v471, 30
    %v473 = vsub.s32 %v469, %v472
    %vm474 = vcmp.lt.s32.totalorder %v473, 0
    %v475 = vsub.s32 0, %v473
    %v476 = vsel %vm474, %v475, %v473
    %v477 = vclz %v476
    %v478 = vsub.s32 %v477, 2
    %vm479 = vcmp.gt.s32.totalorder 0, %v478
    %v480 = vsel %vm479, 0, %v478
    %v481 = vsub.s32 32, %v480
    %v482 = vshll.u32 %v473, %v480
    %v483 = vshrl.u32 %v465, %v481
    %v484 = vor.u32 %v482, %v483
    %v485 = vsub.s32 4294967266, %v480
    %v486 = vadd.s32 %v485, 127
    %v487 = vshll.u32 %v486, 23
    %v488 = vor.u32 4788187, %v487
    %v489 = vand.u32 2147483647, %v488
    %v491 = vcvt.s32.f32 %v484
    %v492 = vmul.f32 %v491, %v489
    %v493 = vxor.u32 %v492, 2147483648
    %v494 = vsel %vm411, %v493, %v492
    %v495 = vsub.s32 4, %v471
    %v496 = vsel %vm411, %v495, %v471
    %v497 = vsel %vm410, %v199, %v494
    %v498 = vsel %vm410, 0, %v496
    %v499 = vcosq.f32.pop %v497
    %v500 = vsinq.f32.pop %v497
    %vm501 = vweird.f32 %v199
    %v502 = vadd.s32 %v498, 3
    %v503 = vand.u32 %v502, 3
    %vm504 = vcmp.lt.s32.totalorder %v503, 2
    %vm505 = vcmp.eq.s32.totalorder %v503, 0
    %v506 = vxor.u32 %v500, 2147483648
    %v507 = vsel %vm505, %v499, %v506
    %vm508 = vcmp.eq.s32.totalorder %v503, 2
    %v509 = vxor.u32 %v499, 2147483648
    %v510 = vsel %vm508, %v509, %v500
    %v511 = vsel %vm504, %v507, %v510
    %v512 = vsel %vm501, nan, %v511
    %v513 = vand.u32 2147483647, %v200
    %vm514 = vcmp.le.f32.partialorder %v513, 0.7853982
    %vm515 = vcmp.lt.s32.totalorder %v200, 0
    %v516 = vand.u32 %v200, 2139095040
    %v517 = vshrl.u32 %v516, 23
    %v518 = vsub.s32 %v517, 127
    %v519 = vand.u32 2147483647, %v200
    %v520 = vand.u32 %v519, 8388607
    %v521 = vor.u32 %v520, 8388608
    %v522 = vsub.s32 0, %v521
    %v523 = vadd.s32 %v518, 1
    %vm524 = vcmp.gt.s32.totalorder %v523, 0
    %v525 = vsel %vm524, %v523, 0
    %v526 = vshrl.u32 %v525, 5
    %v527 = vand.u32 %v525, 31
    %v528 = vsub.s32 32, %v527
    %v529 = vshrl.u32 683565275, %v528
    %v530 = vshll.u32 683565275, %v527
    %v531 = vshrl.u32 2475754826, %v528
    %v532 = vor.u32 %v530, %v531
    %v533 = vshll.u32 2475754826, %v527
    %v534 = vshrl.u32 2131351028, %v528
    %v535 = vor.u32 %v533, %v534
    %v536 = vshll.u32 2131351028, %v527
    %v537 = vshrl.u32 2102212464, %v528
    %v538 = vor.u32 %v536, %v537
    %v539 = vshll.u32 2102212464, %v527
    %v540 = vshrl.u32 920167782, %v528
    %v541 = vor.u32 %v539, %v540
    %v542 = vshll.u32 920167782, %v527
    %v543 = vshrl.u32 1326507024, %v528
    %v544 = vor.u32 %v542, %v543
    %vm545 = vcmp.lt.s32.totalorder %v526, 1
    %vm546 = vcmp.lt.s32.totalorder %v526, 2
    %vm547 = vcmp.lt.s32.totalorder %v526, 3
    %vm548 = vcmp.lt.s32.totalorder %v526, 4
    %v549 = vsel %vm545, %v529, %v532
    %v550 = vsel %vm548, %v538, 2102212464
    %v551 = vsel %vm547, %v535, %v550
    %v552 = vsel %vm546, %v549, %v551
    %v553 = vsel %vm545, %v532, %v535
    %v554 = vsel %vm548, %v541, 920167782
    %v555 = vsel %vm547, %v538, %v554
    %v556 = vsel %vm546, %v553, %v555
    %v557 = vsel %vm545, %v535, %v538
    %v558 = vsel %vm548, %v544, 1326507024
    %v559 = vsel %vm547, %v541, %v558
    %v560 = vsel %vm546, %v557, %v559
    %v561 = vshll.u32 %v521, 8
    %v562 = vmul.u32.u64.compose %v561, %v560
    %v563 = vextract.low.u32 %v562
    %v564 = vextract.high.u32 %v562
    %v565 = vmul.u32.u64.compose %v561, %v556
    %v566 = vextract.low.u32 %v565
    %v567 = vextract.high.u32 %v565
    %v568 = vmul.u32 %v561, %v552
    %v569 = vadd.s32 %v564, %v566
    %vm570 = vc.u32 %v564, %v566
    %v571 = vadd.s32 %v567, 1
    %v572 = vsel %vm570, %v571, %v567
    %v573 = vadd.s32 %v568, %v572
    %v574 = vadd.s32 %v573, 536870912
    %v575 = vshrl.u32 %v574, 30
    %v576 = vshll.u32 %v575, 30
    %v577 = vsub.s32 %v573, %v576
    %vm578 = vcmp.lt.s32.totalorder %v577, 0
    %v579 = vsub.s32 0, %v577
    %v580 = vsel %vm578, %v579, %v577
    %v581 = vclz %v580
    %v582 = vsub.s32 %v581, 2
    %vm583 = vcmp.gt.s32.totalorder 0, %v582
    %v584 = vsel %vm583, 0, %v582
    %v585 = vsub.s32 32, %v584
    %v586 = vshll.u32 %v577, %v584
    %v587 = vshrl.u32 %v569, %v585
    %v588 = vor.u32 %v586, %v587
    %v589 = vsub.s32 4294967266, %v584
    %v590 = vadd.s32 %v589, 127
    %v591 = vshll.u32 %v590, 23
    %v592 = vor.u32 4788187, %v591
    %v593 = vand.u32 2147483647, %v592
    %v595 = vcvt.s32.f32 %v588
    %v596 = vmul.f32 %v595, %v593
    %v597 = vxor.u32 %v596, 2147483648
    %v598 = vsel %vm515, %v597, %v596
    %v599 = vsub.s32 4, %v575
    %v600 = vsel %vm515, %v599, %v575
    %v601 = vsel %vm514, %v200, %v598
    %v602 = vsel %vm514, 0, %v600
    %v603 = vcosq.f32.pop %v601
    %v604 = vsinq.f32.pop %v601
    %vm605 = vweird.f32 %v200
    %v606 = vadd.s32 %v602, 3
    %v607 = vand.u32 %v606, 3
    %vm608 = vcmp.lt.s32.totalorder %v607, 2
    %vm609 = vcmp.eq.s32.totalorder %v607, 0
    %v610 = vxor.u32 %v604, 2147483648
    %v611 = vsel %vm609, %v603, %v610
    %vm612 = vcmp.eq.s32.totalorder %v607, 2
    %v613 = vxor.u32 %v603, 2147483648
    %v614 = vsel %vm612, %v613, %v604
    %v615 = vsel %vm608, %v611, %v614
    %v616 = vsel %vm605, nan, %v615
    %v617 = vstv %s192
    %v618 = vmul.f32 %v617, %v304
    %v619 = vmul.f32 %v617, %v408
    %v620 = vmul.f32 %v617, %v512
    %v621 = vmul.f32 %v617, %v616
    %v622 = vadd.f32 %v188, %v618
    %v623 = vadd.f32 %v189, %v619
    %v624 = vadd.f32 %v190, %v620
    %v625 = vadd.f32 %v191, %v621
    %s626 = sld [smem:[#allocation3 + $0x8]]
    %v627 = vstv %s626
    %v628 = vmul.f32 %v627, %v40
    %v629 = vmul.f32 %v627, %v41
    %v630 = vmul.f32 %v627, %v42
    %v631 = vmul.f32 %v627, %v43
    %v632 = vadd.f32 %v622, %v628
    %v633 = vadd.f32 %v623, %v629
    %v634 = vadd.f32 %v624, %v630
    %v635 = vadd.f32 %v625, %v631
    %636 = vst [vmem:[#allocation8] sm:$0xff] %v632
    %637 = vst [vmem:[#allocation8 + $0x8] sm:$0xff] %v633
    %638 = vst [vmem:[#allocation8 + $0x10] sm:$0xff] %v634
    %639 = vst [vmem:[#allocation8 + $0x18] sm:$0xff] %v635
    // Predicated region
    $region10: #{tpu_custom_call.1} parent=1 // pred_check
      _
    $region11: #{tpu_custom_call.1} parent=1 // pred_check_branch
      %641 = sbr.rel (0) target = $region13
    $region12: #{tpu_custom_call.1} parent=1 // pred_region
      %s643 = ssub.s32 512, 512
      %644 = vsyncadd [#allocation7], %s643
      %s645 = sshll.u32 [#allocation8], 4
      %s646 = int_to_ptr.vmem [resolvable:$true] %s645
      %651 = dma.vmem_to_hbm [thread:$0]  %s646, 512, %s3, [#allocation7], 256, 256, 16
    $region13: #{tpu_custom_call.1} parent=1 // pred_fallthru
      _
    // Predicated region
    $region14: #{tpu_custom_call.1} parent=1 // pred_check
      _
    $region15: #{tpu_custom_call.1} parent=1 // pred_check_branch
      %653 = sbr.rel (0) target = $region17
    $region16: #{tpu_custom_call.1} parent=1 // pred_region
      %654 = dma.done [#allocation7], 512
    $region17: #{tpu_custom_call.1} parent=1 // pred_fallthru
      _
    %655 = vsyncpa [#allocation6], 1
    %656 = vsyncpa [#allocation7], 1

</llo_original>
